<compile_context>
chip_gen: v5e
topology: v5e:2x2
jax: 0.10.0
libtpu: 0.0.40
codegen_flags: <defaults>
</compile_context>

<pallas_src>
import functools

import jax
import jax.numpy as jnp
from jax.experimental import pallas as pl
from jax.experimental.pallas import tpu as pltpu


def _mix32(x):
    """murmur3 fmix32 finalizer on int32 (wrap-around arithmetic).

    Logical right shifts are emulated with (arithmetic shift & mask) so only plain
    int32 VPU ops are used — portable to both Mosaic and interpret mode."""
    x = x ^ ((x >> 16) & jnp.int32(0x0000FFFF))
    x = x * jnp.int32(-2048144789)          # 0x85EBCA6B
    x = x ^ ((x >> 13) & jnp.int32(0x0007FFFF))
    x = x * jnp.int32(-1028477387)          # 0xC2B2AE35
    x = x ^ ((x >> 16) & jnp.int32(0x0000FFFF))
    return x


def _word_embedding_kernel(ids_ref, table_ref, seed_ref, out_ref, *, dropout_p):
    # ids_ref:   (TN, 1)  int32   VMEM  - token ids for this tile
    #            TODO(synk): make ids lane-dense / SMEM when switching to gather.
    # table_ref: (V, D)   float32 VMEM  - full table (V = ntoken + 1); constant
    #                                     index_map -> resident across grid steps
    # seed_ref:  (1,)     int32   SMEM  - dropout seed
    # out_ref:   (TN, D)  float32 VMEM
    ids = ids_ref[...]                     # (TN, 1)
    table = table_ref[...]                 # (V, D)
    tn = ids.shape[0]
    v = table.shape[0]
    d = out_ref.shape[1]

    # Embedding gather as one-hot @ table on the MXU.  The padding row (index
    # ntoken) is all zeros, so padding tokens produce zero vectors, matching
    # nn.Embedding(padding_idx=ntoken).
    onehot = (ids == jax.lax.broadcasted_iota(jnp.int32, (tn, v), 1)).astype(table.dtype)
    emb = jnp.dot(onehot, table, preferred_element_type=jnp.float32)

    if dropout_p > 0.0:
        # Inverted dropout: keep w.p. (1-p), scale kept values by 1/(1-p).
        # Counter = global element index -> mask depends only on (seed, position),
        # not on the tiling.
        # TODO(synk): RNG stream cannot bit-match torch.nn.Dropout; semantics identical.
        seed = seed_ref[0]
        row = jax.lax.broadcasted_iota(jnp.int32, (tn, d), 0)
        col = jax.lax.broadcasted_iota(jnp.int32, (tn, d), 1)
        g_row = pl.program_id(0) * tn + row           # global token index
        ctr = g_row * d + col                         # global element index (wraps mod 2^32)
        bits = _mix32(ctr + seed * jnp.int32(-1640531527))   # 0x9E3779B9
        r31 = (bits >> 1) & jnp.int32(0x7FFFFFFF)     # uniform in [0, 2^31)
        thr = jnp.int32(min(int(round(dropout_p * (1 << 31))), (1 << 31) - 1))
        keep = r31 >= thr                             # P(keep) = 1 - dropout_p
        emb = jnp.where(keep,
                        emb * jnp.float32(1.0 / (1.0 - dropout_p)),
                        jnp.float32(0.0))

    out_ref[...] = emb.astype(out_ref.dtype)


def word_embedding_forward(x, table, *, dropout_p=0.0, seed=0, token_tile=256):
    """Pallas implementation of WordEmbedding.forward.

    x:     (B, S) int32 token ids in [0, ntoken]  (ntoken == padding id)
    table: (ntoken + 1, emb_dim) float32 embedding weights (last row = zeros)
    returns (B, S, emb_dim) float32
    """
    B, S = x.shape
    V, D = table.shape
    assert 0.0 <= dropout_p < 1.0, "dropout_p must be in [0, 1)"

    n = B * S
    num_tiles = -(-n // token_tile)          # ceil-div; pad instead of asserting
    n_pad = num_tiles * token_tile

    ids = x.reshape(n).astype(jnp.int32)
    if n_pad != n:
        ids = jnp.pad(ids, (0, n_pad - n))   # padded rows are sliced off below
    ids = ids.reshape(n_pad, 1)
    seed_arr = jnp.array([seed], dtype=jnp.int32)

    kernel = functools.partial(_word_embedding_kernel, dropout_p=float(dropout_p))

    out = pl.pallas_call(
        kernel,
        out_shape=jax.ShapeDtypeStruct((n_pad, D), jnp.float32),
        grid_spec=pltpu.PrefetchScalarGridSpec(
            num_scalar_prefetch=0,
            grid=(num_tiles,),
            in_specs=[
                pl.BlockSpec((token_tile, 1), lambda i: (i, 0)),      # ids tile
                pl.BlockSpec((V, D), lambda i: (0, 0)),               # full table, resident
                pl.BlockSpec(memory_space=pltpu.MemorySpace.SMEM),    # seed scalar
            ],
            out_specs=pl.BlockSpec((token_tile, D), lambda i: (i, 0)),
        ),
        compiler_params=pltpu.CompilerParams(
            dimension_semantics=("parallel",),   # independent tiles -> v7x dual-TC
        ),
        cost_estimate=pl.CostEstimate(
            flops=2 * n_pad * V * D,
            transcendentals=0,
            bytes_accessed=4 * (n_pad * D + n_pad + V * D),
        ),
    )(ids, table, seed_arr)

    if n_pad != n:
        out = out[:n]
    return out.reshape(B, S, D)


if __name__ == "__main__":
    # Module config (small, synthetic): ntoken vocab + 1 padding row.
    ntoken, emb_dim, dropout = 50, 128, 0.25
    B, S = 2, 8

    key = jax.random.PRNGKey(0)
    k_w, k_x = jax.random.split(key)

    # nn.Embedding(ntoken+1, emb_dim, padding_idx=ntoken): padding row is zero.
    table = jax.random.normal(k_w, (ntoken + 1, emb_dim), dtype=jnp.float32)
    table = table.at[ntoken].set(0.0)

    # Token ids, possibly including the padding id (== ntoken).
    x = jax.random.randint(k_x, (B, S), 0, ntoken + 1, dtype=jnp.int32)

    # Correctness: embedding lookup with dropout disabled vs. plain-JAX reference.
    out_nodrop = word_embedding_forward(x, table, dropout_p=0.0)
    jax.block_until_ready(out_nodrop)
    ref = table[x]
    assert out_nodrop.shape == (B, S, emb_dim)
    assert jnp.allclose(out_nodrop, ref, atol=1e-5), "embedding lookup mismatch"

    # Full forward (embedding + dropout), as in the PyTorch module's forward().
    out = word_embedding_forward(x, table, dropout_p=dropout, seed=42)
    jax.block_until_ready(out)
    assert out.shape == (B, S, emb_dim)
    # Inverted-dropout invariant: every element is either 0 or ref / (1 - p).
    scaled_back = out * (1.0 - dropout)
    assert bool(jnp.all((out == 0.0) | (jnp.abs(scaled_back - ref) < 1e-4)))
    assert bool(jnp.any(out != 0.0))

    print("KERNEL_OK")
</pallas_src>

<mosaic_0001>
module attributes {stable_mosaic.version = 11 : i64} {
  func.func @_word_embedding_kernel(%arg0: i32, %arg1: memref<256x1xi32, #tpu.memory_space<vmem>>, %arg2: memref<51x128xf32, #tpu.memory_space<vmem>>, %arg3: memref<1xi32, #tpu.memory_space<smem>>, %arg4: memref<256x128xf32, #tpu.memory_space<vmem>>) attributes {dimension_semantics = [#tpu.dimension_semantics<parallel>], iteration_bounds = array<i64: 1>, scalar_prefetch = 0 : i64, scratch_operands = 0 : i64, tpu.core_type = #tpu.core_type<tc>, window_params = [{transform_indices = @transform_0, window_bounds = array<i64: 256, 1>}, {pipeline_mode = #tpu.pipeline_mode<synchronous>, transform_indices = @transform_1, window_bounds = array<i64: 51, 128>}, {transform_indices = @transform_2, window_bounds = array<i64: 1>}, {transform_indices = @transform_3, window_bounds = array<i64: 256, 128>}]} {
    %c0 = arith.constant 0 : index
    %c0_0 = arith.constant 0 : index
    %0 = vector.load %arg1[%c0, %c0_0] : memref<256x1xi32, #tpu.memory_space<vmem>>, vector<256x1xi32>
    %c0_1 = arith.constant 0 : index
    %c0_2 = arith.constant 0 : index
    %1 = vector.load %arg2[%c0_1, %c0_2] : memref<51x128xf32, #tpu.memory_space<vmem>>, vector<51x128xf32>
    %2 = tpu.iota {dimensions = array<i32: 1>} : vector<256x51xi32>
    %3 = vector.broadcast %0 : vector<256x1xi32> to vector<256x51xi32>
    %4 = arith.cmpi eq, %3, %2 : vector<256x51xi32>
    %5 = arith.extui %4 : vector<256x51xi1> to vector<256x51xi32>
    %6 = arith.sitofp %5 : vector<256x51xi32> to vector<256x51xf32>
    %cst = arith.constant dense<0.000000e+00> : vector<256x128xf32>
    %7 = tpu.matmul %6, %1, %cst {dimension_numbers = #tpu.dot_dimension_numbers<[1], [0], [0], [1], [0, 0, 1, 1], [], []>} : vector<256x51xf32>, vector<51x128xf32>, vector<256x128xf32> -> vector<256x128xf32>
    %c0_3 = arith.constant 0 : index
    %c0_4 = arith.constant 0 : index
    %8 = vector.load %arg4[%c0_3, %c0_4] : memref<256x128xf32, #tpu.memory_space<vmem>>, vector<256x128xf32>
    tpu.vector_store %arg4[%c0_3, %c0_4], %7 {strides = array<i32>} : memref<256x128xf32, #tpu.memory_space<vmem>>, vector<256x128xf32>,
    return
  }
  func.func @transform_0(%arg0: i32) -> (i32, i32) {
    %c0_i32 = arith.constant 0 : i32
    %c0_i32_0 = arith.constant 0 : i32
    return %arg0, %c0_i32 : i32, i32
  }
  func.func @transform_1(%arg0: i32) -> (i32, i32) {
    %c0_i32 = arith.constant 0 : i32
    %c0_i32_0 = arith.constant 0 : i32
    %c0_i32_1 = arith.constant 0 : i32
    return %c0_i32, %c0_i32_0 : i32, i32
  }
  func.func @transform_2(%arg0: i32) -> i32 {
    %c0_i32 = arith.constant 0 : i32
    %c0_i32_0 = arith.constant 0 : i32
    return %c0_i32 : i32
  }
  func.func @transform_3(%arg0: i32) -> (i32, i32) {
    %c0_i32 = arith.constant 0 : i32
    %c0_i32_0 = arith.constant 0 : i32
    return %arg0, %c0_i32 : i32, i32
  }
}

</mosaic_0001>

<llo_original>
// kernel: tpu_custom_call.1
$region0: #{tpu_custom_call.1}
  #allocation0 [shape = 'u32[]', space=smem, size = 0x4, offset = 0x4, fixed_abs, tag = 'smem constant byte address 0x4 - core index']
  #allocation1 [shape = 'u32[72,128]{1,0:T(1,128)}', space=vmem, size = 0x9000, scoped, tag = 'internal scratch']
  #allocation2 [shape = 's32[1]{0:T(128)S(6)}', space=smem, size = 0x200, scoped, tag = 'scoped memory for tpu_custom_call.1']
  %s0 = inlined_call_operand.vmem [shape: s32[256,1], index: 0, kind: input, shape index: {}]
  %s1 = inlined_call_operand.vmem [shape: f32[51,128], index: 1, kind: input, shape index: {}]
  %s2 = inlined_call_operand.<no memory space> [shape: s32[1], index: 2, kind: input, shape index: {}]
  %s3 = inlined_call_operand.hbm [shape: f32[256,128], index: 3, kind: output, shape index: {}]
  %s4 = sld [smem:[#allocation0]]
  $region22: #{tpu_custom_call.1} parent=0
    _
  %s6 = ssub.s32 1, %s4
  %s7 = scalar_select 0, %s6, %s4
  %8 = sst [smem:[#allocation2]] %s2
  $region1: #{tpu_custom_call.1} parent=0
    #allocation3 [shape = 'u8[131072]{0}', space=vmem, size = 0x20000, scoped, tag = 'output window, operand 0, single buffered']
    #allocation4 [shape = 's32[1]{0}', space=sflag, size = 0x4, scoped, tag = 'scoped memory for tpu_custom_call.1']
    %9 = vsyncpa [#allocation4], 0
    // Predicated region
    $region2: #{tpu_custom_call.1} parent=1 // pred_check
      _
    $region3: #{tpu_custom_call.1} parent=1 // pred_check_branch
      %11 = sbr.rel (0) target = $region5
    $region4: #{tpu_custom_call.1} parent=1 // pred_region
      _
    $region5: #{tpu_custom_call.1} parent=1 // pred_fallthru
      _
    // Predicated region
    $region6: #{tpu_custom_call.1} parent=1 // pred_check
      _
    $region7: #{tpu_custom_call.1} parent=1 // pred_check_branch
      %13 = sbr.rel (0) target = $region9
    $region8: #{tpu_custom_call.1} parent=1 // pred_region
      _
    $region9: #{tpu_custom_call.1} parent=1 // pred_fallthru
      _
    // Predicated region
    $region10: #{tpu_custom_call.1} parent=1 // pred_check
      _
    $region11: #{tpu_custom_call.1} parent=1 // pred_check_branch
      %15 = sbr.rel (0) target = $region13
    $region12: #{tpu_custom_call.1} parent=1 // pred_region
      _
    $region13: #{tpu_custom_call.1} parent=1 // pred_fallthru
      _
    %v16 = vld [vmem:[%s0] sm:$0xff]
    %v17 = vld [vmem:[%s0 + $0x8] sm:$0xff]
    %v18 = vld [vmem:[%s0 + $0x10] sm:$0xff]
    %v19 = vld [vmem:[%s0 + $0x18] sm:$0xff]
    %v20 = vld [vmem:[%s0 + $0x20] sm:$0xff]
    %v21 = vld [vmem:[%s0 + $0x28] sm:$0xff]
    %v22 = vld [vmem:[%s0 + $0x30] sm:$0xff]
    %v23 = vld [vmem:[%s0 + $0x38] sm:$0xff]
    %v24 = vld [vmem:[%s0 + $0x40] sm:$0xff]
    %v25 = vld [vmem:[%s0 + $0x48] sm:$0xff]
    %v26 = vld [vmem:[%s0 + $0x50] sm:$0xff]
    %v27 = vld [vmem:[%s0 + $0x58] sm:$0xff]
    %v28 = vld [vmem:[%s0 + $0x60] sm:$0xff]
    %v29 = vld [vmem:[%s0 + $0x68] sm:$0xff]
    %v30 = vld [vmem:[%s0 + $0x70] sm:$0xff]
    %v31 = vld [vmem:[%s0 + $0x78] sm:$0xff]
    %v32 = vld [vmem:[%s0 + $0x80] sm:$0xff]
    %v33 = vld [vmem:[%s0 + $0x88] sm:$0xff]
    %v34 = vld [vmem:[%s0 + $0x90] sm:$0xff]
    %v35 = vld [vmem:[%s0 + $0x98] sm:$0xff]
    %v36 = vld [vmem:[%s0 + $0xa0] sm:$0xff]
    %v37 = vld [vmem:[%s0 + $0xa8] sm:$0xff]
    %v38 = vld [vmem:[%s0 + $0xb0] sm:$0xff]
    %v39 = vld [vmem:[%s0 + $0xb8] sm:$0xff]
    %v40 = vld [vmem:[%s0 + $0xc0] sm:$0xff]
    %v41 = vld [vmem:[%s0 + $0xc8] sm:$0xff]
    %v42 = vld [vmem:[%s0 + $0xd0] sm:$0xff]
    %v43 = vld [vmem:[%s0 + $0xd8] sm:$0xff]
    %v44 = vld [vmem:[%s0 + $0xe0] sm:$0xff]
    %v45 = vld [vmem:[%s0 + $0xe8] sm:$0xff]
    %v46 = vld [vmem:[%s0 + $0xf0] sm:$0xff]
    %v47 = vld [vmem:[%s0 + $0xf8] sm:$0xff]
    %v48 = vld [vmem:[%s1] sm:$0xff]
    %v49 = vld [vmem:[%s1 + $0x8] sm:$0xff]
    %v50 = vld [vmem:[%s1 + $0x10] sm:$0xff]
    %v51 = vld [vmem:[%s1 + $0x18] sm:$0xff]
    %v52 = vld [vmem:[%s1 + $0x20] sm:$0xff]
    %v53 = vld [vmem:[%s1 + $0x28] sm:$0xff]
    %v54 = vld [vmem:[%s1 + $0x30] sm:$0x7]
    %v55 = vlaneseq
    %v56 = vand.u32 %v55, 127
    %57 = vset.pattern.permute.xlu0 0
    %58 = vperm.xlu0 %57, %v16
    %v59 = vpop.permute.xlu0 %58
    %60 = vset.pattern.permute.xlu0 0
    %61 = vperm.xlu0 %60, %v17
    %v62 = vpop.permute.xlu0 %61
    %63 = vset.pattern.permute.xlu0 0
    %64 = vperm.xlu0 %63, %v18
    %v65 = vpop.permute.xlu0 %64
    %66 = vset.pattern.permute.xlu0 0
    %67 = vperm.xlu0 %66, %v19
    %v68 = vpop.permute.xlu0 %67
    %69 = vset.pattern.permute.xlu0 0
    %70 = vperm.xlu0 %69, %v20
    %v71 = vpop.permute.xlu0 %70
    %72 = vset.pattern.permute.xlu0 0
    %73 = vperm.xlu0 %72, %v21
    %v74 = vpop.permute.xlu0 %73
    %75 = vset.pattern.permute.xlu0 0
    %76 = vperm.xlu0 %75, %v22
    %v77 = vpop.permute.xlu0 %76
    %78 = vset.pattern.permute.xlu0 0
    %79 = vperm.xlu0 %78, %v23
    %v80 = vpop.permute.xlu0 %79
    %81 = vset.pattern.permute.xlu0 0
    %82 = vperm.xlu0 %81, %v24
    %v83 = vpop.permute.xlu0 %82
    %84 = vset.pattern.permute.xlu0 0
    %85 = vperm.xlu0 %84, %v25
    %v86 = vpop.permute.xlu0 %85
    %87 = vset.pattern.permute.xlu0 0
    %88 = vperm.xlu0 %87, %v26
    %v89 = vpop.permute.xlu0 %88
    %90 = vset.pattern.permute.xlu0 0
    %91 = vperm.xlu0 %90, %v27
    %v92 = vpop.permute.xlu0 %91
    %93 = vset.pattern.permute.xlu0 0
    %94 = vperm.xlu0 %93, %v28
    %v95 = vpop.permute.xlu0 %94
    %96 = vset.pattern.permute.xlu0 0
    %97 = vperm.xlu0 %96, %v29
    %v98 = vpop.permute.xlu0 %97
    %99 = vset.pattern.permute.xlu0 0
    %100 = vperm.xlu0 %99, %v30
    %v101 = vpop.permute.xlu0 %100
    %102 = vset.pattern.permute.xlu0 0
    %103 = vperm.xlu0 %102, %v31
    %v104 = vpop.permute.xlu0 %103
    %105 = vset.pattern.permute.xlu0 0
    %106 = vperm.xlu0 %105, %v32
    %v107 = vpop.permute.xlu0 %106
    %108 = vset.pattern.permute.xlu0 0
    %109 = vperm.xlu0 %108, %v33
    %v110 = vpop.permute.xlu0 %109
    %111 = vset.pattern.permute.xlu0 0
    %112 = vperm.xlu0 %111, %v34
    %v113 = vpop.permute.xlu0 %112
    %114 = vset.pattern.permute.xlu0 0
    %115 = vperm.xlu0 %114, %v35
    %v116 = vpop.permute.xlu0 %115
    %117 = vset.pattern.permute.xlu0 0
    %118 = vperm.xlu0 %117, %v36
    %v119 = vpop.permute.xlu0 %118
    %120 = vset.pattern.permute.xlu0 0
    %121 = vperm.xlu0 %120, %v37
    %v122 = vpop.permute.xlu0 %121
    %123 = vset.pattern.permute.xlu0 0
    %124 = vperm.xlu0 %123, %v38
    %v125 = vpop.permute.xlu0 %124
    %126 = vset.pattern.permute.xlu0 0
    %127 = vperm.xlu0 %126, %v39
    %v128 = vpop.permute.xlu0 %127
    %129 = vset.pattern.permute.xlu0 0
    %130 = vperm.xlu0 %129, %v40
    %v131 = vpop.permute.xlu0 %130
    %132 = vset.pattern.permute.xlu0 0
    %133 = vperm.xlu0 %132, %v41
    %v134 = vpop.permute.xlu0 %133
    %135 = vset.pattern.permute.xlu0 0
    %136 = vperm.xlu0 %135, %v42
    %v137 = vpop.permute.xlu0 %136
    %138 = vset.pattern.permute.xlu0 0
    %139 = vperm.xlu0 %138, %v43
    %v140 = vpop.permute.xlu0 %139
    %141 = vset.pattern.permute.xlu0 0
    %142 = vperm.xlu0 %141, %v44
    %v143 = vpop.permute.xlu0 %142
    %144 = vset.pattern.permute.xlu0 0
    %145 = vperm.xlu0 %144, %v45
    %v146 = vpop.permute.xlu0 %145
    %147 = vset.pattern.permute.xlu0 0
    %148 = vperm.xlu0 %147, %v46
    %v149 = vpop.permute.xlu0 %148
    %150 = vset.pattern.permute.xlu0 0
    %151 = vperm.xlu0 %150, %v47
    %v152 = vpop.permute.xlu0 %151
    %vm153 = vcmp.eq.s32.totalorder %v59, %v56
    %vm154 = vcmp.eq.s32.totalorder %v62, %v56
    %vm155 = vcmp.eq.s32.totalorder %v65, %v56
    %vm156 = vcmp.eq.s32.totalorder %v68, %v56
    %vm157 = vcmp.eq.s32.totalorder %v71, %v56
    %vm158 = vcmp.eq.s32.totalorder %v74, %v56
    %vm159 = vcmp.eq.s32.totalorder %v77, %v56
    %vm160 = vcmp.eq.s32.totalorder %v80, %v56
    %vm161 = vcmp.eq.s32.totalorder %v83, %v56
    %vm162 = vcmp.eq.s32.totalorder %v86, %v56
    %vm163 = vcmp.eq.s32.totalorder %v89, %v56
    %vm164 = vcmp.eq.s32.totalorder %v92, %v56
    %vm165 = vcmp.eq.s32.totalorder %v95, %v56
    %vm166 = vcmp.eq.s32.totalorder %v98, %v56
    %vm167 = vcmp.eq.s32.totalorder %v101, %v56
    %vm168 = vcmp.eq.s32.totalorder %v104, %v56
    %vm169 = vcmp.eq.s32.totalorder %v107, %v56
    %vm170 = vcmp.eq.s32.totalorder %v110, %v56
    %vm171 = vcmp.eq.s32.totalorder %v113, %v56
    %vm172 = vcmp.eq.s32.totalorder %v116, %v56
    %vm173 = vcmp.eq.s32.totalorder %v119, %v56
    %vm174 = vcmp.eq.s32.totalorder %v122, %v56
    %vm175 = vcmp.eq.s32.totalorder %v125, %v56
    %vm176 = vcmp.eq.s32.totalorder %v128, %v56
    %vm177 = vcmp.eq.s32.totalorder %v131, %v56
    %vm178 = vcmp.eq.s32.totalorder %v134, %v56
    %vm179 = vcmp.eq.s32.totalorder %v137, %v56
    %vm180 = vcmp.eq.s32.totalorder %v140, %v56
    %vm181 = vcmp.eq.s32.totalorder %v143, %v56
    %vm182 = vcmp.eq.s32.totalorder %v146, %v56
    %vm183 = vcmp.eq.s32.totalorder %v149, %v56
    %vm184 = vcmp.eq.s32.totalorder %v152, %v56
    %v185 = vsel %vm153, 1, 0
    %v186 = vsel %vm154, 1, 0
    %v187 = vsel %vm155, 1, 0
    %v188 = vsel %vm156, 1, 0
    %v189 = vsel %vm157, 1, 0
    %v190 = vsel %vm158, 1, 0
    %v191 = vsel %vm159, 1, 0
    %v192 = vsel %vm160, 1, 0
    %v193 = vsel %vm161, 1, 0
    %v194 = vsel %vm162, 1, 0
    %v195 = vsel %vm163, 1, 0
    %v196 = vsel %vm164, 1, 0
    %v197 = vsel %vm165, 1, 0
    %v198 = vsel %vm166, 1, 0
    %v199 = vsel %vm167, 1, 0
    %v200 = vsel %vm168, 1, 0
    %v201 = vsel %vm169, 1, 0
    %v202 = vsel %vm170, 1, 0
    %v203 = vsel %vm171, 1, 0
    %v204 = vsel %vm172, 1, 0
    %v205 = vsel %vm173, 1, 0
    %v206 = vsel %vm174, 1, 0
    %v207 = vsel %vm175, 1, 0
    %v208 = vsel %vm176, 1, 0
    %v209 = vsel %vm177, 1, 0
    %v210 = vsel %vm178, 1, 0
    %v211 = vsel %vm179, 1, 0
    %v212 = vsel %vm180, 1, 0
    %v213 = vsel %vm181, 1, 0
    %v214 = vsel %vm182, 1, 0
    %v215 = vsel %vm183, 1, 0
    %v216 = vsel %vm184, 1, 0
    %v217 = vcvt.s32.f32 %v185
    %v218 = vcvt.s32.f32 %v186
    %v219 = vcvt.s32.f32 %v187
    %v220 = vcvt.s32.f32 %v188
    %v221 = vcvt.s32.f32 %v189
    %v222 = vcvt.s32.f32 %v190
    %v223 = vcvt.s32.f32 %v191
    %v224 = vcvt.s32.f32 %v192
    %v225 = vcvt.s32.f32 %v193
    %v226 = vcvt.s32.f32 %v194
    %v227 = vcvt.s32.f32 %v195
    %v228 = vcvt.s32.f32 %v196
    %v229 = vcvt.s32.f32 %v197
    %v230 = vcvt.s32.f32 %v198
    %v231 = vcvt.s32.f32 %v199
    %v232 = vcvt.s32.f32 %v200
    %v233 = vcvt.s32.f32 %v201
    %v234 = vcvt.s32.f32 %v202
    %v235 = vcvt.s32.f32 %v203
    %v236 = vcvt.s32.f32 %v204
    %v237 = vcvt.s32.f32 %v205
    %v238 = vcvt.s32.f32 %v206
    %v239 = vcvt.s32.f32 %v207
    %v240 = vcvt.s32.f32 %v208
    %v241 = vcvt.s32.f32 %v209
    %v242 = vcvt.s32.f32 %v210
    %v243 = vcvt.s32.f32 %v211
    %v244 = vcvt.s32.f32 %v212
    %v245 = vcvt.s32.f32 %v213
    %v246 = vcvt.s32.f32 %v214
    %v247 = vcvt.s32.f32 %v215
    %v248 = vcvt.s32.f32 %v216
    %vm249 = vcmask 416768
    %v251 = vsel %vm249, %v217, 0
    %v254 = vsel %vm249, %v218, 0
    %v257 = vsel %vm249, %v219, 0
    %v260 = vsel %vm249, %v220, 0
    %v263 = vsel %vm249, %v221, 0
    %v266 = vsel %vm249, %v222, 0
    %v269 = vsel %vm249, %v223, 0
    %v272 = vsel %vm249, %v224, 0
    %v275 = vsel %vm249, %v225, 0
    %v278 = vsel %vm249, %v226, 0
    %v281 = vsel %vm249, %v227, 0
    %v284 = vsel %vm249, %v228, 0
    %v287 = vsel %vm249, %v229, 0
    %v290 = vsel %vm249, %v230, 0
    %v293 = vsel %vm249, %v231, 0
    %v296 = vsel %vm249, %v232, 0
    %v299 = vsel %vm249, %v233, 0
    %v302 = vsel %vm249, %v234, 0
    %v305 = vsel %vm249, %v235, 0
    %v308 = vsel %vm249, %v236, 0
    %v311 = vsel %vm249, %v237, 0
    %v314 = vsel %vm249, %v238, 0
    %v317 = vsel %vm249, %v239, 0
    %v320 = vsel %vm249, %v240, 0
    %v323 = vsel %vm249, %v241, 0
    %v326 = vsel %vm249, %v242, 0
    %v329 = vsel %vm249, %v243, 0
    %v332 = vsel %vm249, %v244, 0
    %v335 = vsel %vm249, %v245, 0
    %v338 = vsel %vm249, %v246, 0
    %v341 = vsel %vm249, %v247, 0
    %v344 = vsel %vm249, %v248, 0
    %vm346 = vcmask 1042432
    %v348 = vsel %vm346, %v54, 0
    %350 = vmatpush.msra.mxu0 0.0
    %351 = vmatpush.msra.mxu0 0.0
    %352 = vmatpush.msra.mxu0 0.0
    %353 = vmatpush.msra.mxu0 0.0
    %354 = vmatpush.msra.mxu0 0.0
    %355 = vmatpush.msra.mxu0 0.0
    %356 = vmatpush.msra.mxu0 0.0
    %357 = vmatpush.msra.mxu0 0.0
    %358 = vmatpush.msra.mxu0 0.0
    %359 = vmatpush.msra.mxu0 %v348
    %360 = vmatpush.msra.mxu0 %v53
    %361 = vmatpush.msra.mxu0 %v52
    %362 = vmatpush.msra.mxu0 %v51
    %363 = vmatpush.msra.mxu0 %v50
    %364 = vmatpush.msra.mxu0 %v49
    %365 = vmatpush.msra.mxu0 %v48
    %366 = vmatmul.f32.gmra.mxu0 %v251
    %v367 = vpop.f32.mrf.mxu0
    %v368 = vadd.f32 0.0, %v367
    %369 = vmatmul.f32.gmra.mxu0 %v254
    %v370 = vpop.f32.mrf.mxu0
    %v371 = vadd.f32 0.0, %v370
    %372 = vmatmul.f32.gmra.mxu0 %v257
    %v373 = vpop.f32.mrf.mxu0
    %v374 = vadd.f32 0.0, %v373
    %375 = vmatmul.f32.gmra.mxu0 %v260
    %v376 = vpop.f32.mrf.mxu0
    %v377 = vadd.f32 0.0, %v376
    %378 = vmatmul.f32.gmra.mxu0 %v263
    %v379 = vpop.f32.mrf.mxu0
    %v380 = vadd.f32 0.0, %v379
    %381 = vmatmul.f32.gmra.mxu0 %v266
    %v382 = vpop.f32.mrf.mxu0
    %v383 = vadd.f32 0.0, %v382
    %384 = vmatmul.f32.gmra.mxu0 %v269
    %v385 = vpop.f32.mrf.mxu0
    %v386 = vadd.f32 0.0, %v385
    %387 = vmatmul.f32.gmra.mxu0 %v272
    %v388 = vpop.f32.mrf.mxu0
    %v389 = vadd.f32 0.0, %v388
    %390 = vmatmul.f32.gmra.mxu0 %v275
    %v391 = vpop.f32.mrf.mxu0
    %v392 = vadd.f32 0.0, %v391
    %393 = vmatmul.f32.gmra.mxu0 %v278
    %v394 = vpop.f32.mrf.mxu0
    %v395 = vadd.f32 0.0, %v394
    %396 = vmatmul.f32.gmra.mxu0 %v281
    %v397 = vpop.f32.mrf.mxu0
    %v398 = vadd.f32 0.0, %v397
    %399 = vmatmul.f32.gmra.mxu0 %v284
    %v400 = vpop.f32.mrf.mxu0
    %v401 = vadd.f32 0.0, %v400
    %402 = vmatmul.f32.gmra.mxu0 %v287
    %v403 = vpop.f32.mrf.mxu0
    %v404 = vadd.f32 0.0, %v403
    %405 = vmatmul.f32.gmra.mxu0 %v290
    %v406 = vpop.f32.mrf.mxu0
    %v407 = vadd.f32 0.0, %v406
    %408 = vmatmul.f32.gmra.mxu0 %v293
    %v409 = vpop.f32.mrf.mxu0
    %v410 = vadd.f32 0.0, %v409
    %411 = vmatmul.f32.gmra.mxu0 %v296
    %v412 = vpop.f32.mrf.mxu0
    %v413 = vadd.f32 0.0, %v412
    %414 = vmatmul.f32.gmra.mxu0 %v299
    %v415 = vpop.f32.mrf.mxu0
    %v416 = vadd.f32 0.0, %v415
    %417 = vmatmul.f32.gmra.mxu0 %v302
    %v418 = vpop.f32.mrf.mxu0
    %v419 = vadd.f32 0.0, %v418
    %420 = vmatmul.f32.gmra.mxu0 %v305
    %v421 = vpop.f32.mrf.mxu0
    %v422 = vadd.f32 0.0, %v421
    %423 = vmatmul.f32.gmra.mxu0 %v308
    %v424 = vpop.f32.mrf.mxu0
    %v425 = vadd.f32 0.0, %v424
    %426 = vmatmul.f32.gmra.mxu0 %v311
    %v427 = vpop.f32.mrf.mxu0
    %v428 = vadd.f32 0.0, %v427
    %429 = vmatmul.f32.gmra.mxu0 %v314
    %v430 = vpop.f32.mrf.mxu0
    %v431 = vadd.f32 0.0, %v430
    %432 = vmatmul.f32.gmra.mxu0 %v317
    %v433 = vpop.f32.mrf.mxu0
    %v434 = vadd.f32 0.0, %v433
    %435 = vmatmul.f32.gmra.mxu0 %v320
    %v436 = vpop.f32.mrf.mxu0
    %v437 = vadd.f32 0.0, %v436
    %438 = vmatmul.f32.gmra.mxu0 %v323
    %v439 = vpop.f32.mrf.mxu0
    %v440 = vadd.f32 0.0, %v439
    %441 = vmatmul.f32.gmra.mxu0 %v326
    %v442 = vpop.f32.mrf.mxu0
    %v443 = vadd.f32 0.0, %v442
    %444 = vmatmul.f32.gmra.mxu0 %v329
    %v445 = vpop.f32.mrf.mxu0
    %v446 = vadd.f32 0.0, %v445
    %447 = vmatmul.f32.gmra.mxu0 %v332
    %v448 = vpop.f32.mrf.mxu0
    %v449 = vadd.f32 0.0, %v448
    %450 = vmatmul.f32.gmra.mxu0 %v335
    %v451 = vpop.f32.mrf.mxu0
    %v452 = vadd.f32 0.0, %v451
    %453 = vmatmul.f32.gmra.mxu0 %v338
    %v454 = vpop.f32.mrf.mxu0
    %v455 = vadd.f32 0.0, %v454
    %456 = vmatmul.f32.gmra.mxu0 %v341
    %v457 = vpop.f32.mrf.mxu0
    %v458 = vadd.f32 0.0, %v457
    %459 = vmatmul.f32.gmra.mxu0 %v344
    %v460 = vpop.f32.mrf.mxu0
    %v461 = vadd.f32 0.0, %v460
    %462 = vdwg.mxu0
    %463 = vst [vmem:[#allocation3] sm:$0xff] %v368
    %464 = vst [vmem:[#allocation3 + $0x8] sm:$0xff] %v371
    %465 = vst [vmem:[#allocation3 + $0x10] sm:$0xff] %v374
    %466 = vst [vmem:[#allocation3 + $0x18] sm:$0xff] %v377
    %467 = vst [vmem:[#allocation3 + $0x20] sm:$0xff] %v380
    %468 = vst [vmem:[#allocation3 + $0x28] sm:$0xff] %v383
    %469 = vst [vmem:[#allocation3 + $0x30] sm:$0xff] %v386
    %470 = vst [vmem:[#allocation3 + $0x38] sm:$0xff] %v389
    %471 = vst [vmem:[#allocation3 + $0x40] sm:$0xff] %v392
    %472 = vst [vmem:[#allocation3 + $0x48] sm:$0xff] %v395
    %473 = vst [vmem:[#allocation3 + $0x50] sm:$0xff] %v398
    %474 = vst [vmem:[#allocation3 + $0x58] sm:$0xff] %v401
    %475 = vst [vmem:[#allocation3 + $0x60] sm:$0xff] %v404
    %476 = vst [vmem:[#allocation3 + $0x68] sm:$0xff] %v407
    %477 = vst [vmem:[#allocation3 + $0x70] sm:$0xff] %v410
    %478 = vst [vmem:[#allocation3 + $0x78] sm:$0xff] %v413
    %479 = vst [vmem:[#allocation3 + $0x80] sm:$0xff] %v416
    %480 = vst [vmem:[#allocation3 + $0x88] sm:$0xff] %v419
    %481 = vst [vmem:[#allocation3 + $0x90] sm:$0xff] %v422
    %482 = vst [vmem:[#allocation3 + $0x98] sm:$0xff] %v425
    %483 = vst [vmem:[#allocation3 + $0xa0] sm:$0xff] %v428
    %484 = vst [vmem:[#allocation3 + $0xa8] sm:$0xff] %v431
    %485 = vst [vmem:[#allocation3 + $0xb0] sm:$0xff] %v434
    %486 = vst [vmem:[#allocation3 + $0xb8] sm:$0xff] %v437
    %487 = vst [vmem:[#allocation3 + $0xc0] sm:$0xff] %v440
    %488 = vst [vmem:[#allocation3 + $0xc8] sm:$0xff] %v443
    %489 = vst [vmem:[#allocation3 + $0xd0] sm:$0xff] %v446
    %490 = vst [vmem:[#allocation3 + $0xd8] sm:$0xff] %v449
    %491 = vst [vmem:[#allocation3 + $0xe0] sm:$0xff] %v452
    %492 = vst [vmem:[#allocation3 + $0xe8] sm:$0xff] %v455
    %493 = vst [vmem:[#allocation3 + $0xf0] sm:$0xff] %v458
    %494 = vst [vmem:[#allocation3 + $0xf8] sm:$0xff] %v461
    // Predicated region
    $region14: #{tpu_custom_call.1} parent=1 // pred_check
      _
    $region15: #{tpu_custom_call.1} parent=1 // pred_check_branch
      %496 = sbr.rel (0) target = $region17
    $region16: #{tpu_custom_call.1} parent=1 // pred_region
      %498 = vsyncadd [#allocation4], 0
      %s499 = sshll.u32 [#allocation3], 4
      %s500 = int_to_ptr.vmem [resolvable:$true] %s499
      %s501 = sshll.u32 %s3, 4
      %s502 = int_to_ptr.hbm [resolvable:$true] %s501
      %507 = dma.vmem_to_hbm [thread:$0]  %s500, 4096, %s502, [#allocation4], 128, 128, 8
    $region17: #{tpu_custom_call.1} parent=1 // pred_fallthru
      _
    // Predicated region
    $region18: #{tpu_custom_call.1} parent=1 // pred_check
      _
    $region19: #{tpu_custom_call.1} parent=1 // pred_check_branch
      %509 = sbr.rel (0) target = $region21
    $region20: #{tpu_custom_call.1} parent=1 // pred_region
      %511 = dma.done [#allocation4], 4096
    $region21: #{tpu_custom_call.1} parent=1 // pred_fallthru
      _
    %512 = vsyncpa [#allocation4], 1

</llo_original>
